<compile_context>
chip_gen: v7x
topology: tpu7x:2x2x1
jax: 0.10.0
libtpu: 0.0.40
codegen_flags: <defaults>
</compile_context>

<pallas_src>
import math

import jax
import jax.numpy as jnp
import numpy as np
from jax.experimental import pallas as pl
from jax.experimental.pallas import tpu as pltpu

LANE = 128  # vreg lane width


def _sublane(dtype) -> int:
    """Native second-minor tile for dtype: 8 (f32), 16 (bf16), 32 (int8/fp8)."""
    return max(8, 32 // jnp.dtype(dtype).itemsize)


def _vmem_budget_bytes() -> int:
    """Conservative scoped-VMEM budget derived from the actual chip."""
    try:
        cap = int(pltpu.get_tpu_info().vmem_capacity_bytes)
    except Exception:  # pragma: no cover - fall back to the smallest (v7x)
        cap = 64 << 20
    return min(cap // 2, 32 << 20)


def gelu_kernel(x_ref, o_ref):
    f = x_ref[...].astype(jnp.float32)
    c = jnp.float32(math.sqrt(2.0 / math.pi))
    # x**3 -> x*x*x (explicit vmuls); tanh lands on the EUP slot.
    inner = c * (f + jnp.float32(0.044715) * (f * f * f))
    o_ref[...] = (
        jnp.float32(0.5) * f * (jnp.float32(1.0) + jnp.tanh(inner))
    ).astype(o_ref.dtype)


def _gelu_2d(x2):
    """GELU over a lane-dense (R, C) slab with C a multiple of 128. No copies."""
    R, C = x2.shape
    itemsize = jnp.dtype(x2.dtype).itemsize
    sub = _sublane(x2.dtype)

    vmem_budget = _vmem_budget_bytes()
    max_block_bytes = vmem_budget // 4  # in + out, each double-buffered
    row_bytes = C * itemsize
    total_bytes = R * row_bytes

    if total_bytes <= (2 << 20):
        # Small tensor: single full-extent block (splitting only doubles the
        # ~0.35 us per-step overhead with no bandwidth/megacore benefit).
        bm = R
    else:
        # MiB-scale blocks, aiming for >= 2 grid steps (v7x two TensorCores).
        bm_cap = max(sub, (max_block_bytes // row_bytes) // sub * sub)
        half = -(-(-(-R // 2)) // sub) * sub  # ceil(ceil(R/2) / sub) * sub
        bm = min(bm_cap, half)
        if bm >= R:
            bm = R

    num_blocks = pl.cdiv(R, bm)  # edge block masked by Pallas; no row padding

    return pl.pallas_call(
        gelu_kernel,
        out_shape=jax.ShapeDtypeStruct((R, C), x2.dtype),
        grid_spec=pltpu.PrefetchScalarGridSpec(
            num_scalar_prefetch=0,
            grid=(num_blocks,),
            in_specs=[pl.BlockSpec((bm, C), lambda i: (i, 0))],
            out_specs=pl.BlockSpec((bm, C), lambda i: (i, 0)),
        ),
        compiler_params=pltpu.CompilerParams(
            dimension_semantics=("parallel",),
            vmem_limit_bytes=int(vmem_budget),
        ),
        cost_estimate=pl.CostEstimate(
            flops=10 * R * C,
            transcendentals=R * C,
            bytes_accessed=2 * R * C * itemsize,
        ),
    )(x2)


def gelu(x):
    """Tanh-approximation GELU, elementwise over any input shape."""
    orig_shape = x.shape
    n = int(np.prod(orig_shape)) if orig_shape else 1
    if n == 0:
        return x

    if orig_shape and orig_shape[-1] % LANE == 0:
        # Fast path: block over the natural (prod(leading), last_dim) view.
        x2 = x.reshape(-1, orig_shape[-1])  # free reshape, no copy
        return _gelu_2d(x2).reshape(orig_shape)

    if n % LANE == 0:
        # Still copy-free: flatten to a lane-dense width-128 slab.
        x2 = x.reshape(-1, LANE)  # free reshape, no copy
        return _gelu_2d(x2).reshape(orig_shape)

    # Genuinely ragged size: pad the flat view up to a full (sub, 128) tile.
    # TODO(synk): pass n via scalar prefetch and mask the tail store in-kernel
    # to avoid the pad/slice copies; ragged sizes are rare for GPT shapes.
    sub = _sublane(x.dtype)
    rows = -(-n // LANE)
    rows = -(-rows // sub) * sub
    flat = jnp.pad(x.reshape(-1), (0, rows * LANE - n))
    out = _gelu_2d(flat.reshape(rows, LANE))
    return out.reshape(-1)[:n].reshape(orig_shape)


def gelu_ref(x):
    """Pure-JAX reference replicating the PyTorch forward."""
    xf = x.astype(jnp.float32)
    c = np.sqrt(2.0 / np.pi)
    y = 0.5 * xf * (1.0 + jnp.tanh(c * (xf + 0.044715 * xf ** 3)))
    return y.astype(x.dtype)


def _check(x, rtol, atol):
    out = jax.block_until_ready(gelu(x))
    ref = jax.block_until_ready(gelu_ref(x))
    np.testing.assert_allclose(
        np.asarray(out, dtype=np.float32),
        np.asarray(ref, dtype=np.float32),
        rtol=rtol,
        atol=atol,
    )


if __name__ == "__main__":
    key = jax.random.PRNGKey(0)
    k1, k2, k3, k4, k5 = jax.random.split(key, 5)

    # Small GPT-ish shape (batch=2, seq=8, emb=32): flat fast path (no pad).
    _check(jax.random.normal(k1, (2, 8, 32), jnp.float32) * 3.0, 1e-5, 1e-5)

    # Natural last-dim multiple of 128: block over the (B*S, E) view directly.
    _check(jax.random.normal(k2, (4, 16, 768), jnp.float32) * 3.0, 1e-5, 1e-5)

    # Larger tensor (> 2 MiB): exercises the multi-block "parallel" grid path.
    _check(jax.random.normal(k3, (8, 256, 1024), jnp.float32) * 3.0, 1e-5, 1e-5)

    # Ragged size: exercises the pad + slice fallback path.
    _check(jax.random.normal(k4, (3, 7, 33), jnp.float32) * 3.0, 1e-5, 1e-5)

    # bf16 I/O (dtype-aware sublane rounding; f32 math inside the kernel).
    _check(jax.random.normal(k5, (2, 8, 64), jnp.bfloat16) * 3.0, 2e-2, 2e-2)

    print("KERNEL_OK")
</pallas_src>

<mosaic_0001>
module attributes {stable_mosaic.version = 11 : i64} {
  func.func @gelu_kernel(%arg0: i32, %arg1: memref<4x128xf32, #tpu.memory_space<vmem>>, %arg2: memref<4x128xf32, #tpu.memory_space<vmem>>) attributes {dimension_semantics = [#tpu.dimension_semantics<parallel>], iteration_bounds = array<i64: 1>, scalar_prefetch = 0 : i64, scratch_operands = 0 : i64, tpu.core_type = #tpu.core_type<tc>, window_params = [{transform_indices = @transform_0, window_bounds = array<i64: 4, 128>}, {transform_indices = @transform_1, window_bounds = array<i64: 4, 128>}]} {
    %c0 = arith.constant 0 : index
    %c0_0 = arith.constant 0 : index
    %0 = vector.load %arg1[%c0, %c0_0] : memref<4x128xf32, #tpu.memory_space<vmem>>, vector<4x128xf32>
    %1 = arith.mulf %0, %0 : vector<4x128xf32>
    %2 = arith.mulf %1, %0 : vector<4x128xf32>
    %cst = arith.constant 4.471500e-02 : f32
    %3 = vector.broadcast %cst : f32 to vector<4x128xf32>
    %4 = arith.mulf %3, %2 : vector<4x128xf32>
    %5 = arith.addf %0, %4 : vector<4x128xf32>
    %cst_1 = arith.constant 0.797884583 : f32
    %6 = vector.broadcast %cst_1 : f32 to vector<4x128xf32>
    %7 = arith.mulf %6, %5 : vector<4x128xf32>
    %cst_2 = arith.constant 5.000000e-01 : f32
    %8 = vector.broadcast %cst_2 : f32 to vector<4x128xf32>
    %9 = arith.mulf %8, %0 : vector<4x128xf32>
    %10 = math.tanh %7 : vector<4x128xf32>
    %cst_3 = arith.constant 1.000000e+00 : f32
    %11 = vector.broadcast %cst_3 : f32 to vector<4x128xf32>
    %12 = arith.addf %11, %10 : vector<4x128xf32>
    %13 = arith.mulf %9, %12 : vector<4x128xf32>
    %c0_4 = arith.constant 0 : index
    %c0_5 = arith.constant 0 : index
    %14 = vector.load %arg2[%c0_4, %c0_5] : memref<4x128xf32, #tpu.memory_space<vmem>>, vector<4x128xf32>
    tpu.vector_store %arg2[%c0_4, %c0_5], %13 {strides = array<i32>} : memref<4x128xf32, #tpu.memory_space<vmem>>, vector<4x128xf32>,
    return
  }
  func.func @transform_0(%arg0: i32) -> (i32, i32) {
    %c0_i32 = arith.constant 0 : i32
    %c0_i32_0 = arith.constant 0 : i32
    return %arg0, %c0_i32 : i32, i32
  }
  func.func @transform_1(%arg0: i32) -> (i32, i32) {
    %c0_i32 = arith.constant 0 : i32
    %c0_i32_0 = arith.constant 0 : i32
    return %arg0, %c0_i32 : i32, i32
  }
}

</mosaic_0001>

<llo_original>
// kernel: tpu_custom_call.1
$region0: #{tpu_custom_call.1}
  #allocation0 [shape = 'u32[]', space=smem, size = 0x4, offset = 0x4, fixed_abs, tag = 'smem constant byte address 0x4 - core index']
  #allocation1 [shape = 'u32[144,128]{1,0:T(1,128)}', space=vmem, size = 0x12000, scoped, tag = 'internal scratch']
  %s0 = inlined_call_operand.hbm [shape: f32[4,128], index: 0, kind: input, shape index: {}]
  %s1 = inlined_call_operand.hbm [shape: f32[4,128], index: 1, kind: output, shape index: {}]
  %s2 = sld [smem:[#allocation0]]
  $region18: #{tpu_custom_call.1} parent=0
    _
  %s4 = ssub.s32 1, %s2
  %s5 = scalar_select 0, %s4, %s2
  $region1: #{tpu_custom_call.1} parent=0
    #allocation2 [shape = 'u8[2048]{0}', space=vmem, size = 0x800, scoped, tag = 'input window, operand 0, single buffered']
    #allocation3 [shape = 's32[1]{0}', space=sflag, size = 0x4, scoped, tag = 'scoped memory for tpu_custom_call.1']
    #allocation4 [shape = 's32[1]{0}', space=sflag, size = 0x4, scoped, tag = 'scoped memory for tpu_custom_call.1']
    #allocation5 [shape = 'u8[2048]{0}', space=vmem, size = 0x800, scoped, tag = 'output window, operand 0, single buffered']
    %6 = vsyncpa [#allocation3], 0
    %7 = vsyncpa [#allocation4], 0
    // Predicated region
    $region2: #{tpu_custom_call.1} parent=1 // pred_check
      _
    $region3: #{tpu_custom_call.1} parent=1 // pred_check_branch
      %9 = sbr.rel (0) target = $region5
    $region4: #{tpu_custom_call.1} parent=1 // pred_region
      %s11 = ssub.s32 64, 64
      %12 = vsyncadd [#allocation3], %s11
      %s14 = sshll.u32 [#allocation2], 4
      %s15 = int_to_ptr.vmem [resolvable:$true] %s14
      %17 = dma.hbm_to_vmem [thread:$0]  %s0, 64, %s15, [#allocation3]
    $region5: #{tpu_custom_call.1} parent=1 // pred_fallthru
      _
    // Predicated region
    $region6: #{tpu_custom_call.1} parent=1 // pred_check
      _
    $region7: #{tpu_custom_call.1} parent=1 // pred_check_branch
      %19 = sbr.rel (0) target = $region9
    $region8: #{tpu_custom_call.1} parent=1 // pred_region
      %20 = dma.done [#allocation3], 64
    $region9: #{tpu_custom_call.1} parent=1 // pred_fallthru
      _
    %v21 = vld [vmem:[#allocation2] sm:$0xf]
    %v22 = vmul.f32 %v21, %v21
    %v23 = vmul.f32 %v22, %v21
    %v24 = vmul.f32 %v23, 0.044715
    %v25 = vadd.f32 %v21, %v24
    %v26 = vmul.f32 %v25, 0.7978846
    %v27 = vmul.f32 %v21, 0.5
    %v28 = vtanh.pop %v26
    %v29 = vadd.f32 %v28, 1.0
    %v30 = vmul.f32 %v27, %v29
    %31 = vst [vmem:[#allocation5] sm:$0xf] %v30
    // Predicated region
    $region10: #{tpu_custom_call.1} parent=1 // pred_check
      _
    $region11: #{tpu_custom_call.1} parent=1 // pred_check_branch
      %33 = sbr.rel (0) target = $region13
    $region12: #{tpu_custom_call.1} parent=1 // pred_region
      %s35 = ssub.s32 64, 64
      %36 = vsyncadd [#allocation4], %s35
      %s38 = sshll.u32 [#allocation5], 4
      %s39 = int_to_ptr.vmem [resolvable:$true] %s38
      %41 = dma.vmem_to_hbm [thread:$0]  %s39, 64, %s1, [#allocation4]
    $region13: #{tpu_custom_call.1} parent=1 // pred_fallthru
      _
    // Predicated region
    $region14: #{tpu_custom_call.1} parent=1 // pred_check
      _
    $region15: #{tpu_custom_call.1} parent=1 // pred_check_branch
      %43 = sbr.rel (0) target = $region17
    $region16: #{tpu_custom_call.1} parent=1 // pred_region
      %44 = dma.done [#allocation4], 64
    $region17: #{tpu_custom_call.1} parent=1 // pred_fallthru
      _
    %45 = vsyncpa [#allocation3], 1
    %46 = vsyncpa [#allocation4], 1

</llo_original>
